<compile_context>
chip_gen: v7x
topology: tpu7x:2x2x1
jax: 0.10.0
libtpu: 0.0.40
codegen_flags: <defaults>
</compile_context>

<pallas_src>
import functools

import jax
import jax.numpy as jnp
from jax.experimental import pallas as pl
from jax.experimental.pallas import tpu as pltpu


def _resblock_kernel(x_ref, w1_ref, s1_ref, t1_ref, w2_ref, b2_ref,
                     row_ref, col_ref, o_ref, *, NB, H, W, res_scale, neg_slope):
    # x_ref:  (NB, C, HW)  input block, original dtype (channels on sublanes,
    #                      flattened H*W on lanes -> lane-dense loads/stores)
    # w*_ref: (C, 9C)      bf16 conv weights, tap-major blocks (k = ky*3 + kx)
    # s1/t1:  (C, 1)       f32 fused conv1-bias + eval-BN scale / shift
    # b2_ref: (C, 1)       f32 conv2 bias
    # row/col:(1, HW)      int32 pixel row / column index on the lane axis
    # o_ref:  (NB, C, HW)  output block
    C = o_ref.shape[1]
    HW = H * W

    rows = row_ref[...]
    cols = col_ref[...]

    # Per-tap validity masks: True where the 3x3 neighbour lies inside the image.
    # Conv zero-padding == zeroing the invalid lanes of the shifted view.
    masks = []
    for ky in range(3):
        for kx in range(3):
            conds = []
            if ky == 0:
                conds.append(rows >= 1)
            if ky == 2:
                conds.append(rows <= H - 2)
            if kx == 0:
                conds.append(cols >= 1)
            if kx == 2:
                conds.append(cols <= W - 2)
            m = None
            for c_ in conds:
                m = c_ if m is None else jnp.logical_and(m, c_)
            masks.append(m)          # None == all-valid (center column/row taps)

    def im2col(v):
        # v: (C, HW) f32 -> (9C, HW) bf16 MXU operand (taps concatenated on sublanes).
        blocks = []
        for ky in range(3):
            for kx in range(3):
                k = ky * 3 + kx
                off = (ky - 1) * W + (kx - 1)        # lane offset of this tap's neighbour
                blk = v if off == 0 else pltpu.roll(v, shift=(-off) % HW, axis=1)
                if masks[k] is not None:
                    blk = jnp.where(masks[k], blk, 0.0)
                blocks.append(blk)
        return jnp.concatenate(blocks, axis=0).astype(jnp.bfloat16)

    w1 = w1_ref[...]
    w2 = w2_ref[...]
    s1 = s1_ref[...]
    t1 = t1_ref[...]
    b2 = b2_ref[...]

    for b in range(NB):                                             # trace-time unrolled
        xv = x_ref[b].astype(jnp.float32)                           # (C, HW)
        # conv1: one K=9C MXU matmul, f32 accumulation
        y1 = jnp.dot(w1, im2col(xv), preferred_element_type=jnp.float32)
        pre = y1 * s1 + t1                                          # bias + eval-BN affine
        h = jnp.maximum(pre, neg_slope * pre)                       # LeakyReLU(neg_slope)
        # conv2: one K=9C MXU matmul + bias
        y2 = jnp.dot(w2, im2col(h), preferred_element_type=jnp.float32) + b2
        # residual: identity + res_scale * conv2(...)
        o_ref[b] = (xv + res_scale * y2).astype(o_ref.dtype)


def _pick_batch_block(n, c, hw, itemsize):
    """Largest divisor of n keeping the per-step x+out blocks under ~2 MiB and, when
    n >= 2, still leaving >= 2 grid steps so both v7x TensorCores get work."""
    best = 1
    for nb in range(1, n + 1):
        if n % nb:
            continue
        if 2 * nb * c * hw * itemsize > 2 * 1024 * 1024:
            continue
        if n >= 2 and n // nb < 2:
            continue
        best = nb
    return best


def residual_block_bn(x, conv1_w, conv1_b, conv2_w, conv2_b,
                      bn_gamma, bn_beta, bn_mean, bn_var,
                      *, eps=1e-5, res_scale=1.0, neg_slope=0.1):
    """x: (N, C, H, W); conv*_w: (C, C, 3, 3); conv*_b, bn_*: (C,)."""
    N, C, H, W = x.shape
    HW = H * W
    f32 = jnp.float32

    x_flat = x.reshape(N, C, HW)                       # contiguous reshape: no HBM copy

    # (Cout, Cin, 3, 3) -> (Cout, ky, kx, Cin) -> (Cout, 9*Cin); tap k = ky*3 + kx.
    # bf16 MXU operands (f32 accumulation stays in the kernel).
    w1_cat = jnp.transpose(conv1_w.astype(f32), (0, 2, 3, 1)).reshape(C, 9 * C)
    w2_cat = jnp.transpose(conv2_w.astype(f32), (0, 2, 3, 1)).reshape(C, 9 * C)
    w1_cat = w1_cat.astype(jnp.bfloat16)
    w2_cat = w2_cat.astype(jnp.bfloat16)

    # Fold conv1 bias + eval-mode BatchNorm into one per-channel affine (f32).
    inv_std = jax.lax.rsqrt(bn_var.astype(f32) + eps)
    scale1 = (bn_gamma.astype(f32) * inv_std).reshape(C, 1)
    shift1 = (bn_beta.astype(f32)
              + bn_gamma.astype(f32) * inv_std
              * (conv1_b.astype(f32) - bn_mean.astype(f32))).reshape(C, 1)
    b2 = conv2_b.astype(f32).reshape(C, 1)

    # Pixel row / column indices along the flattened lane axis (for boundary masks).
    pix = jnp.arange(HW, dtype=jnp.int32)
    rows = (pix // W).reshape(1, HW)
    cols = (pix % W).reshape(1, HW)

    NB = _pick_batch_block(N, C, HW, x.dtype.itemsize)
    grid = (N // NB,)

    kernel = functools.partial(_resblock_kernel, NB=NB, H=H, W=W,
                               res_scale=float(res_scale), neg_slope=float(neg_slope))

    # VMEM budget: double-buffered in/out blocks + resident constants + in-kernel
    # temporaries (two bf16 im2col operands + a few f32 (C, HW) values) + 25% headroom.
    in_block = NB * C * HW * x.dtype.itemsize
    out_block = NB * C * HW * x.dtype.itemsize
    const_bytes = 2 * (C * 9 * C * 2) + 3 * C * 4 + 2 * HW * 4
    temp_bytes = 2 * (9 * C * HW * 2) + 6 * (C * HW * 4)
    vmem_limit = int(1.25 * (2 * in_block + 2 * out_block + const_bytes + temp_bytes))
    vmem_limit = min(max(vmem_limit, 2 * 1024 * 1024), 64 * 1024 * 1024)

    cost = pl.CostEstimate(
        flops=2 * 2 * 9 * C * C * HW * N,                 # two K=9C matmuls per element
        transcendentals=0,
        bytes_accessed=N * C * HW * 2 * x.dtype.itemsize + const_bytes)

    out_flat = pl.pallas_call(
        kernel,
        out_shape=jax.ShapeDtypeStruct((N, C, HW), x.dtype),
        grid=grid,
        in_specs=[
            pl.BlockSpec((NB, C, HW), lambda n: (n, 0, 0)),   # x (read from HBM once)
            pl.BlockSpec((C, 9 * C), lambda n: (0, 0)),       # conv1 weights (bf16)
            pl.BlockSpec((C, 1), lambda n: (0, 0)),           # fused scale
            pl.BlockSpec((C, 1), lambda n: (0, 0)),           # fused shift
            pl.BlockSpec((C, 9 * C), lambda n: (0, 0)),       # conv2 weights (bf16)
            pl.BlockSpec((C, 1), lambda n: (0, 0)),           # conv2 bias
            pl.BlockSpec((1, HW), lambda n: (0, 0)),          # pixel row ids
            pl.BlockSpec((1, HW), lambda n: (0, 0)),          # pixel col ids
        ],
        out_specs=pl.BlockSpec((NB, C, HW), lambda n: (n, 0, 0)),
        compiler_params=pltpu.CompilerParams(
            dimension_semantics=("parallel",),
            vmem_limit_bytes=vmem_limit),
        cost_estimate=cost,
    )(x_flat, w1_cat, scale1, shift1, w2_cat, b2, rows, cols)

    return out_flat.reshape(N, C, H, W)                # contiguous reshape: no HBM copy


def residual_block_bn_ref(x, conv1_w, conv1_b, conv2_w, conv2_b,
                          bn_gamma, bn_beta, bn_mean, bn_var,
                          *, eps=1e-5, res_scale=1.0, neg_slope=0.1):
    """Pure-JAX reference matching the PyTorch forward (eval-mode BN)."""
    dn = jax.lax.conv_dimension_numbers(x.shape, conv1_w.shape, ("NCHW", "OIHW", "NCHW"))
    y = jax.lax.conv_general_dilated(x, conv1_w, (1, 1), ((1, 1), (1, 1)),
                                     dimension_numbers=dn,
                                     precision=jax.lax.Precision.HIGHEST)
    y = y + conv1_b[None, :, None, None]
    y = (bn_gamma[None, :, None, None] * (y - bn_mean[None, :, None, None])
         * jax.lax.rsqrt(bn_var[None, :, None, None] + eps)
         + bn_beta[None, :, None, None])
    y = jnp.maximum(y, neg_slope * y)                      # LeakyReLU(0.1)
    y = jax.lax.conv_general_dilated(y, conv2_w, (1, 1), ((1, 1), (1, 1)),
                                     dimension_numbers=dn,
                                     precision=jax.lax.Precision.HIGHEST)
    y = y + conv2_b[None, :, None, None]
    return x + res_scale * y


if __name__ == "__main__":
    N, C, H, W = 2, 8, 16, 16
    res_scale = 1.0
    eps = 1e-5

    key = jax.random.PRNGKey(0)
    k = jax.random.split(key, 9)
    x = jax.random.normal(k[0], (N, C, H, W), jnp.float32)
    conv1_w = 0.1 * jax.random.normal(k[1], (C, C, 3, 3), jnp.float32)   # kaiming*0.1-like
    conv1_b = 0.05 * jax.random.normal(k[2], (C,), jnp.float32)
    conv2_w = 0.1 * jax.random.normal(k[3], (C, C, 3, 3), jnp.float32)
    conv2_b = 0.05 * jax.random.normal(k[4], (C,), jnp.float32)
    bn_gamma = 1.0 + 0.1 * jax.random.normal(k[5], (C,), jnp.float32)
    bn_beta = 0.1 * jax.random.normal(k[6], (C,), jnp.float32)
    bn_mean = 0.1 * jax.random.normal(k[7], (C,), jnp.float32)
    bn_var = 1.0 + 0.1 * jnp.abs(jax.random.normal(k[8], (C,), jnp.float32))

    out = residual_block_bn(x, conv1_w, conv1_b, conv2_w, conv2_b,
                            bn_gamma, bn_beta, bn_mean, bn_var,
                            eps=eps, res_scale=res_scale)
    out = jax.block_until_ready(out)

    ref = residual_block_bn_ref(x, conv1_w, conv1_b, conv2_w, conv2_b,
                                bn_gamma, bn_beta, bn_mean, bn_var,
                                eps=eps, res_scale=res_scale)
    assert out.shape == (N, C, H, W)
    # 2e-2 tolerance: the kernel runs the two convs on the MXU with bfloat16 operands
    # (f32 accumulation) per the perf review, while the reference uses HIGHEST-precision
    # f32 convs; genuine indexing/boundary bugs are O(1), far above this tolerance.
    max_diff = jnp.max(jnp.abs(out - ref))
    assert jnp.allclose(out, ref, atol=2e-2, rtol=2e-2), \
        f"mismatch vs reference, max abs diff={max_diff}"
    print("KERNEL_OK")
</pallas_src>

<mosaic_0001>
module attributes {stable_mosaic.version = 11 : i64} {
  func.func @_resblock_kernel(%arg0: i32, %arg1: memref<1x8x256xf32, #tpu.memory_space<vmem>>, %arg2: memref<8x72xbf16, #tpu.memory_space<vmem>>, %arg3: memref<8x1xf32, #tpu.memory_space<vmem>>, %arg4: memref<8x1xf32, #tpu.memory_space<vmem>>, %arg5: memref<8x72xbf16, #tpu.memory_space<vmem>>, %arg6: memref<8x1xf32, #tpu.memory_space<vmem>>, %arg7: memref<1x256xi32, #tpu.memory_space<vmem>>, %arg8: memref<1x256xi32, #tpu.memory_space<vmem>>, %arg9: memref<1x8x256xf32, #tpu.memory_space<vmem>>) attributes {dimension_semantics = [#tpu.dimension_semantics<parallel>], iteration_bounds = array<i64: 2>, scalar_prefetch = 0 : i64, scratch_operands = 0 : i64, tpu.core_type = #tpu.core_type<tc>, window_params = [{transform_indices = @transform_0, window_bounds = array<i64: 1, 8, 256>}, {pipeline_mode = #tpu.pipeline_mode<synchronous>, transform_indices = @transform_1, window_bounds = array<i64: 8, 72>}, {pipeline_mode = #tpu.pipeline_mode<synchronous>, transform_indices = @transform_2, window_bounds = array<i64: 8, 1>}, {pipeline_mode = #tpu.pipeline_mode<synchronous>, transform_indices = @transform_3, window_bounds = array<i64: 8, 1>}, {pipeline_mode = #tpu.pipeline_mode<synchronous>, transform_indices = @transform_4, window_bounds = array<i64: 8, 72>}, {pipeline_mode = #tpu.pipeline_mode<synchronous>, transform_indices = @transform_5, window_bounds = array<i64: 8, 1>}, {pipeline_mode = #tpu.pipeline_mode<synchronous>, transform_indices = @transform_6, window_bounds = array<i64: 1, 256>}, {pipeline_mode = #tpu.pipeline_mode<synchronous>, transform_indices = @transform_7, window_bounds = array<i64: 1, 256>}, {transform_indices = @transform_8, window_bounds = array<i64: 1, 8, 256>}]} {
    %c0 = arith.constant 0 : index
    %c0_0 = arith.constant 0 : index
    %0 = vector.load %arg7[%c0, %c0_0] : memref<1x256xi32, #tpu.memory_space<vmem>>, vector<1x256xi32>
    %c0_1 = arith.constant 0 : index
    %c0_2 = arith.constant 0 : index
    %1 = vector.load %arg8[%c0_1, %c0_2] : memref<1x256xi32, #tpu.memory_space<vmem>>, vector<1x256xi32>
    %c1_i32 = arith.constant 1 : i32
    %2 = vector.broadcast %c1_i32 : i32 to vector<1x256xi32>
    %3 = arith.cmpi sge, %0, %2 : vector<1x256xi32>
    %c1_i32_3 = arith.constant 1 : i32
    %4 = vector.broadcast %c1_i32_3 : i32 to vector<1x256xi32>
    %5 = arith.cmpi sge, %1, %4 : vector<1x256xi32>
    %6 = arith.andi %3, %5 : vector<1x256xi1>
    %c1_i32_4 = arith.constant 1 : i32
    %7 = vector.broadcast %c1_i32_4 : i32 to vector<1x256xi32>
    %8 = arith.cmpi sge, %0, %7 : vector<1x256xi32>
    %c1_i32_5 = arith.constant 1 : i32
    %9 = vector.broadcast %c1_i32_5 : i32 to vector<1x256xi32>
    %10 = arith.cmpi sge, %0, %9 : vector<1x256xi32>
    %c14_i32 = arith.constant 14 : i32
    %11 = vector.broadcast %c14_i32 : i32 to vector<1x256xi32>
    %12 = arith.cmpi sle, %1, %11 : vector<1x256xi32>
    %13 = arith.andi %10, %12 : vector<1x256xi1>
    %c1_i32_6 = arith.constant 1 : i32
    %14 = vector.broadcast %c1_i32_6 : i32 to vector<1x256xi32>
    %15 = arith.cmpi sge, %1, %14 : vector<1x256xi32>
    %c14_i32_7 = arith.constant 14 : i32
    %16 = vector.broadcast %c14_i32_7 : i32 to vector<1x256xi32>
    %17 = arith.cmpi sle, %1, %16 : vector<1x256xi32>
    %c14_i32_8 = arith.constant 14 : i32
    %18 = vector.broadcast %c14_i32_8 : i32 to vector<1x256xi32>
    %19 = arith.cmpi sle, %0, %18 : vector<1x256xi32>
    %c1_i32_9 = arith.constant 1 : i32
    %20 = vector.broadcast %c1_i32_9 : i32 to vector<1x256xi32>
    %21 = arith.cmpi sge, %1, %20 : vector<1x256xi32>
    %22 = arith.andi %19, %21 : vector<1x256xi1>
    %c14_i32_10 = arith.constant 14 : i32
    %23 = vector.broadcast %c14_i32_10 : i32 to vector<1x256xi32>
    %24 = arith.cmpi sle, %0, %23 : vector<1x256xi32>
    %c14_i32_11 = arith.constant 14 : i32
    %25 = vector.broadcast %c14_i32_11 : i32 to vector<1x256xi32>
    %26 = arith.cmpi sle, %0, %25 : vector<1x256xi32>
    %c14_i32_12 = arith.constant 14 : i32
    %27 = vector.broadcast %c14_i32_12 : i32 to vector<1x256xi32>
    %28 = arith.cmpi sle, %1, %27 : vector<1x256xi32>
    %29 = arith.andi %26, %28 : vector<1x256xi1>
    %c0_13 = arith.constant 0 : index
    %c0_14 = arith.constant 0 : index
    %30 = vector.load %arg2[%c0_13, %c0_14] : memref<8x72xbf16, #tpu.memory_space<vmem>>, vector<8x72xbf16>
    %c0_15 = arith.constant 0 : index
    %c0_16 = arith.constant 0 : index
    %31 = vector.load %arg5[%c0_15, %c0_16] : memref<8x72xbf16, #tpu.memory_space<vmem>>, vector<8x72xbf16>
    %c0_17 = arith.constant 0 : index
    %c0_18 = arith.constant 0 : index
    %32 = vector.load %arg3[%c0_17, %c0_18] : memref<8x1xf32, #tpu.memory_space<vmem>>, vector<8x1xf32>
    %c0_19 = arith.constant 0 : index
    %c0_20 = arith.constant 0 : index
    %33 = vector.load %arg4[%c0_19, %c0_20] : memref<8x1xf32, #tpu.memory_space<vmem>>, vector<8x1xf32>
    %c0_21 = arith.constant 0 : index
    %c0_22 = arith.constant 0 : index
    %34 = vector.load %arg6[%c0_21, %c0_22] : memref<8x1xf32, #tpu.memory_space<vmem>>, vector<8x1xf32>
    %c0_23 = arith.constant 0 : index
    %c0_24 = arith.constant 0 : index
    %c0_25 = arith.constant 0 : index
    %35 = vector.load %arg1[%c0_23, %c0_24, %c0_25] : memref<1x8x256xf32, #tpu.memory_space<vmem>>, vector<1x8x256xf32>
    %36 = vector.shape_cast %35 : vector<1x8x256xf32> to vector<8x256xf32>
    %c17_i32 = arith.constant 17 : i32
    %37 = tpu.dynamic_rotate %36 by %c17_i32 dim 1 : vector<8x256xf32>, i32 -> vector<8x256xf32>
    %cst = arith.constant 0.000000e+00 : f32
    %38 = vector.shape_cast %6 : vector<1x256xi1> to vector<1x256xi1>
    %39 = vector.broadcast %38 : vector<1x256xi1> to vector<8x256xi1>
    %40 = vector.broadcast %cst : f32 to vector<8x256xf32>
    %41 = arith.select %39, %37, %40 : vector<8x256xi1>, vector<8x256xf32>
    %c16_i32 = arith.constant 16 : i32
    %42 = tpu.dynamic_rotate %36 by %c16_i32 dim 1 : vector<8x256xf32>, i32 -> vector<8x256xf32>
    %cst_26 = arith.constant 0.000000e+00 : f32
    %43 = vector.shape_cast %8 : vector<1x256xi1> to vector<1x256xi1>
    %44 = vector.broadcast %43 : vector<1x256xi1> to vector<8x256xi1>
    %45 = vector.broadcast %cst_26 : f32 to vector<8x256xf32>
    %46 = arith.select %44, %42, %45 : vector<8x256xi1>, vector<8x256xf32>
    %c15_i32 = arith.constant 15 : i32
    %47 = tpu.dynamic_rotate %36 by %c15_i32 dim 1 : vector<8x256xf32>, i32 -> vector<8x256xf32>
    %cst_27 = arith.constant 0.000000e+00 : f32
    %48 = vector.shape_cast %13 : vector<1x256xi1> to vector<1x256xi1>
    %49 = vector.broadcast %48 : vector<1x256xi1> to vector<8x256xi1>
    %50 = vector.broadcast %cst_27 : f32 to vector<8x256xf32>
    %51 = arith.select %49, %47, %50 : vector<8x256xi1>, vector<8x256xf32>
    %c1_i32_28 = arith.constant 1 : i32
    %52 = tpu.dynamic_rotate %36 by %c1_i32_28 dim 1 : vector<8x256xf32>, i32 -> vector<8x256xf32>
    %cst_29 = arith.constant 0.000000e+00 : f32
    %53 = vector.shape_cast %15 : vector<1x256xi1> to vector<1x256xi1>
    %54 = vector.broadcast %53 : vector<1x256xi1> to vector<8x256xi1>
    %55 = vector.broadcast %cst_29 : f32 to vector<8x256xf32>
    %56 = arith.select %54, %52, %55 : vector<8x256xi1>, vector<8x256xf32>
    %c255_i32 = arith.constant 255 : i32
    %57 = tpu.dynamic_rotate %36 by %c255_i32 dim 1 : vector<8x256xf32>, i32 -> vector<8x256xf32>
    %cst_30 = arith.constant 0.000000e+00 : f32
    %58 = vector.shape_cast %17 : vector<1x256xi1> to vector<1x256xi1>
    %59 = vector.broadcast %58 : vector<1x256xi1> to vector<8x256xi1>
    %60 = vector.broadcast %cst_30 : f32 to vector<8x256xf32>
    %61 = arith.select %59, %57, %60 : vector<8x256xi1>, vector<8x256xf32>
    %c241_i32 = arith.constant 241 : i32
    %62 = tpu.dynamic_rotate %36 by %c241_i32 dim 1 : vector<8x256xf32>, i32 -> vector<8x256xf32>
    %cst_31 = arith.constant 0.000000e+00 : f32
    %63 = vector.shape_cast %22 : vector<1x256xi1> to vector<1x256xi1>
    %64 = vector.broadcast %63 : vector<1x256xi1> to vector<8x256xi1>
    %65 = vector.broadcast %cst_31 : f32 to vector<8x256xf32>
    %66 = arith.select %64, %62, %65 : vector<8x256xi1>, vector<8x256xf32>
    %c240_i32 = arith.constant 240 : i32
    %67 = tpu.dynamic_rotate %36 by %c240_i32 dim 1 : vector<8x256xf32>, i32 -> vector<8x256xf32>
    %cst_32 = arith.constant 0.000000e+00 : f32
    %68 = vector.shape_cast %24 : vector<1x256xi1> to vector<1x256xi1>
    %69 = vector.broadcast %68 : vector<1x256xi1> to vector<8x256xi1>
    %70 = vector.broadcast %cst_32 : f32 to vector<8x256xf32>
    %71 = arith.select %69, %67, %70 : vector<8x256xi1>, vector<8x256xf32>
    %c239_i32 = arith.constant 239 : i32
    %72 = tpu.dynamic_rotate %36 by %c239_i32 dim 1 : vector<8x256xf32>, i32 -> vector<8x256xf32>
    %cst_33 = arith.constant 0.000000e+00 : f32
    %73 = vector.shape_cast %29 : vector<1x256xi1> to vector<1x256xi1>
    %74 = vector.broadcast %73 : vector<1x256xi1> to vector<8x256xi1>
    %75 = vector.broadcast %cst_33 : f32 to vector<8x256xf32>
    %76 = arith.select %74, %72, %75 : vector<8x256xi1>, vector<8x256xf32>
    %77 = tpu.concatenate %41, %46, %51, %56, %36, %61, %66, %71, %76 in 0 : vector<8x256xf32>, vector<8x256xf32>, vector<8x256xf32>, vector<8x256xf32>, vector<8x256xf32>, vector<8x256xf32>, vector<8x256xf32>, vector<8x256xf32>, vector<8x256xf32> -> vector<72x256xf32>
    %78 = arith.truncf %77 : vector<72x256xf32> to vector<72x256xbf16>
    %cst_34 = arith.constant dense<0.000000e+00> : vector<8x256xf32>
    %79 = tpu.matmul %30, %78, %cst_34 {dimension_numbers = #tpu.dot_dimension_numbers<[1], [0], [0], [1], [0, 0, 1, 1], [], []>} : vector<8x72xbf16>, vector<72x256xbf16>, vector<8x256xf32> -> vector<8x256xf32>
    %80 = vector.broadcast %32 : vector<8x1xf32> to vector<8x256xf32>
    %81 = arith.mulf %79, %80 : vector<8x256xf32>
    %82 = vector.broadcast %33 : vector<8x1xf32> to vector<8x256xf32>
    %83 = arith.addf %81, %82 : vector<8x256xf32>
    %cst_35 = arith.constant 1.000000e-01 : f32
    %84 = vector.broadcast %cst_35 : f32 to vector<8x256xf32>
    %85 = arith.mulf %84, %83 : vector<8x256xf32>
    %86 = arith.maximumf %83, %85 : vector<8x256xf32>
    %c17_i32_36 = arith.constant 17 : i32
    %87 = tpu.dynamic_rotate %86 by %c17_i32_36 dim 1 : vector<8x256xf32>, i32 -> vector<8x256xf32>
    %cst_37 = arith.constant 0.000000e+00 : f32
    %88 = vector.shape_cast %6 : vector<1x256xi1> to vector<1x256xi1>
    %89 = vector.broadcast %88 : vector<1x256xi1> to vector<8x256xi1>
    %90 = vector.broadcast %cst_37 : f32 to vector<8x256xf32>
    %91 = arith.select %89, %87, %90 : vector<8x256xi1>, vector<8x256xf32>
    %c16_i32_38 = arith.constant 16 : i32
    %92 = tpu.dynamic_rotate %86 by %c16_i32_38 dim 1 : vector<8x256xf32>, i32 -> vector<8x256xf32>
    %cst_39 = arith.constant 0.000000e+00 : f32
    %93 = vector.shape_cast %8 : vector<1x256xi1> to vector<1x256xi1>
    %94 = vector.broadcast %93 : vector<1x256xi1> to vector<8x256xi1>
    %95 = vector.broadcast %cst_39 : f32 to vector<8x256xf32>
    %96 = arith.select %94, %92, %95 : vector<8x256xi1>, vector<8x256xf32>
    %c15_i32_40 = arith.constant 15 : i32
    %97 = tpu.dynamic_rotate %86 by %c15_i32_40 dim 1 : vector<8x256xf32>, i32 -> vector<8x256xf32>
    %cst_41 = arith.constant 0.000000e+00 : f32
    %98 = vector.shape_cast %13 : vector<1x256xi1> to vector<1x256xi1>
    %99 = vector.broadcast %98 : vector<1x256xi1> to vector<8x256xi1>
    %100 = vector.broadcast %cst_41 : f32 to vector<8x256xf32>
    %101 = arith.select %99, %97, %100 : vector<8x256xi1>, vector<8x256xf32>
    %c1_i32_42 = arith.constant 1 : i32
    %102 = tpu.dynamic_rotate %86 by %c1_i32_42 dim 1 : vector<8x256xf32>, i32 -> vector<8x256xf32>
    %cst_43 = arith.constant 0.000000e+00 : f32
    %103 = vector.shape_cast %15 : vector<1x256xi1> to vector<1x256xi1>
    %104 = vector.broadcast %103 : vector<1x256xi1> to vector<8x256xi1>
    %105 = vector.broadcast %cst_43 : f32 to vector<8x256xf32>
    %106 = arith.select %104, %102, %105 : vector<8x256xi1>, vector<8x256xf32>
    %c255_i32_44 = arith.constant 255 : i32
    %107 = tpu.dynamic_rotate %86 by %c255_i32_44 dim 1 : vector<8x256xf32>, i32 -> vector<8x256xf32>
    %cst_45 = arith.constant 0.000000e+00 : f32
    %108 = vector.shape_cast %17 : vector<1x256xi1> to vector<1x256xi1>
    %109 = vector.broadcast %108 : vector<1x256xi1> to vector<8x256xi1>
    %110 = vector.broadcast %cst_45 : f32 to vector<8x256xf32>
    %111 = arith.select %109, %107, %110 : vector<8x256xi1>, vector<8x256xf32>
    %c241_i32_46 = arith.constant 241 : i32
    %112 = tpu.dynamic_rotate %86 by %c241_i32_46 dim 1 : vector<8x256xf32>, i32 -> vector<8x256xf32>
    %cst_47 = arith.constant 0.000000e+00 : f32
    %113 = vector.shape_cast %22 : vector<1x256xi1> to vector<1x256xi1>
    %114 = vector.broadcast %113 : vector<1x256xi1> to vector<8x256xi1>
    %115 = vector.broadcast %cst_47 : f32 to vector<8x256xf32>
    %116 = arith.select %114, %112, %115 : vector<8x256xi1>, vector<8x256xf32>
    %c240_i32_48 = arith.constant 240 : i32
    %117 = tpu.dynamic_rotate %86 by %c240_i32_48 dim 1 : vector<8x256xf32>, i32 -> vector<8x256xf32>
    %cst_49 = arith.constant 0.000000e+00 : f32
    %118 = vector.shape_cast %24 : vector<1x256xi1> to vector<1x256xi1>
    %119 = vector.broadcast %118 : vector<1x256xi1> to vector<8x256xi1>
    %120 = vector.broadcast %cst_49 : f32 to vector<8x256xf32>
    %121 = arith.select %119, %117, %120 : vector<8x256xi1>, vector<8x256xf32>
    %c239_i32_50 = arith.constant 239 : i32
    %122 = tpu.dynamic_rotate %86 by %c239_i32_50 dim 1 : vector<8x256xf32>, i32 -> vector<8x256xf32>
    %cst_51 = arith.constant 0.000000e+00 : f32
    %123 = vector.shape_cast %29 : vector<1x256xi1> to vector<1x256xi1>
    %124 = vector.broadcast %123 : vector<1x256xi1> to vector<8x256xi1>
    %125 = vector.broadcast %cst_51 : f32 to vector<8x256xf32>
    %126 = arith.select %124, %122, %125 : vector<8x256xi1>, vector<8x256xf32>
    %127 = tpu.concatenate %91, %96, %101, %106, %86, %111, %116, %121, %126 in 0 : vector<8x256xf32>, vector<8x256xf32>, vector<8x256xf32>, vector<8x256xf32>, vector<8x256xf32>, vector<8x256xf32>, vector<8x256xf32>, vector<8x256xf32>, vector<8x256xf32> -> vector<72x256xf32>
    %128 = arith.truncf %127 : vector<72x256xf32> to vector<72x256xbf16>
    %cst_52 = arith.constant dense<0.000000e+00> : vector<8x256xf32>
    %129 = tpu.matmul %31, %128, %cst_52 {dimension_numbers = #tpu.dot_dimension_numbers<[1], [0], [0], [1], [0, 0, 1, 1], [], []>} : vector<8x72xbf16>, vector<72x256xbf16>, vector<8x256xf32> -> vector<8x256xf32>
    %130 = vector.broadcast %34 : vector<8x1xf32> to vector<8x256xf32>
    %131 = arith.addf %129, %130 : vector<8x256xf32>
    %cst_53 = arith.constant 1.000000e+00 : f32
    %132 = vector.broadcast %cst_53 : f32 to vector<8x256xf32>
    %133 = arith.mulf %132, %131 : vector<8x256xf32>
    %134 = arith.addf %36, %133 : vector<8x256xf32>
    %c0_54 = arith.constant 0 : index
    %c0_55 = arith.constant 0 : index
    %c0_56 = arith.constant 0 : index
    %135 = vector.load %arg9[%c0_54, %c0_55, %c0_56] : memref<1x8x256xf32, #tpu.memory_space<vmem>>, vector<1x8x256xf32>
    %136 = vector.shape_cast %135 : vector<1x8x256xf32> to vector<8x256xf32>
    %137 = vector.shape_cast %134 : vector<8x256xf32> to vector<1x8x256xf32>
    tpu.vector_store %arg9[%c0_54, %c0_55, %c0_56], %137 {strides = array<i32>} : memref<1x8x256xf32, #tpu.memory_space<vmem>>, vector<1x8x256xf32>,
    return
  }
  func.func @transform_0(%arg0: i32) -> (i32, i32, i32) {
    %c0_i32 = arith.constant 0 : i32
    %c0_i32_0 = arith.constant 0 : i32
    %c0_i32_1 = arith.constant 0 : i32
    return %arg0, %c0_i32, %c0_i32_0 : i32, i32, i32
  }
  func.func @transform_1(%arg0: i32) -> (i32, i32) {
    %c0_i32 = arith.constant 0 : i32
    %c0_i32_0 = arith.constant 0 : i32
    %c0_i32_1 = arith.constant 0 : i32
    return %c0_i32, %c0_i32_0 : i32, i32
  }
  func.func @transform_2(%arg0: i32) -> (i32, i32) {
    %c0_i32 = arith.constant 0 : i32
    %c0_i32_0 = arith.constant 0 : i32
    %c0_i32_1 = arith.constant 0 : i32
    return %c0_i32, %c0_i32_0 : i32, i32
  }
  func.func @transform_3(%arg0: i32) -> (i32, i32) {
    %c0_i32 = arith.constant 0 : i32
    %c0_i32_0 = arith.constant 0 : i32
    %c0_i32_1 = arith.constant 0 : i32
    return %c0_i32, %c0_i32_0 : i32, i32
  }
  func.func @transform_4(%arg0: i32) -> (i32, i32) {
    %c0_i32 = arith.constant 0 : i32
    %c0_i32_0 = arith.constant 0 : i32
    %c0_i32_1 = arith.constant 0 : i32
    return %c0_i32, %c0_i32_0 : i32, i32
  }
  func.func @transform_5(%arg0: i32) -> (i32, i32) {
    %c0_i32 = arith.constant 0 : i32
    %c0_i32_0 = arith.constant 0 : i32
    %c0_i32_1 = arith.constant 0 : i32
    return %c0_i32, %c0_i32_0 : i32, i32
  }
  func.func @transform_6(%arg0: i32) -> (i32, i32) {
    %c0_i32 = arith.constant 0 : i32
    %c0_i32_0 = arith.constant 0 : i32
    %c0_i32_1 = arith.constant 0 : i32
    return %c0_i32, %c0_i32_0 : i32, i32
  }
  func.func @transform_7(%arg0: i32) -> (i32, i32) {
    %c0_i32 = arith.constant 0 : i32
    %c0_i32_0 = arith.constant 0 : i32
    %c0_i32_1 = arith.constant 0 : i32
    return %c0_i32, %c0_i32_0 : i32, i32
  }
  func.func @transform_8(%arg0: i32) -> (i32, i32, i32) {
    %c0_i32 = arith.constant 0 : i32
    %c0_i32_0 = arith.constant 0 : i32
    %c0_i32_1 = arith.constant 0 : i32
    return %arg0, %c0_i32, %c0_i32_0 : i32, i32, i32
  }
}

</mosaic_0001>

<llo_original>
// kernel: tpu_custom_call.1
$region0: #{tpu_custom_call.1}
  #allocation0 [shape = 'u32[]', space=smem, size = 0x4, offset = 0x4, fixed_abs, tag = 'smem constant byte address 0x4 - core index']
  #allocation1 [shape = 'u32[144,128]{1,0:T(1,128)}', space=vmem, size = 0x12000, scoped, tag = 'internal scratch']
  %s0 = inlined_call_operand.hbm [shape: f32[2,8,256], index: 0, kind: input, shape index: {}]
  %s1 = inlined_call_operand.vmem [shape: bf16[8,72], index: 1, kind: input, shape index: {}]
  %s2 = inlined_call_operand.vmem [shape: f32[8,1], index: 2, kind: input, shape index: {}]
  %s3 = inlined_call_operand.vmem [shape: f32[8,1], index: 3, kind: input, shape index: {}]
  %s4 = inlined_call_operand.vmem [shape: bf16[8,72], index: 4, kind: input, shape index: {}]
  %s5 = inlined_call_operand.vmem [shape: f32[8,1], index: 5, kind: input, shape index: {}]
  %s6 = inlined_call_operand.vmem [shape: s32[1,256], index: 6, kind: input, shape index: {}]
  %s7 = inlined_call_operand.vmem [shape: s32[1,256], index: 7, kind: input, shape index: {}]
  %s8 = inlined_call_operand.hbm [shape: f32[2,8,256], index: 8, kind: output, shape index: {}]
  %s9 = sld [smem:[#allocation0]]
  $region69: #{tpu_custom_call.1} parent=0
    _
  %s11 = ssub.s32 1, %s9
  %s12 = scalar_select 0, %s11, %s9
  $region1: #{tpu_custom_call.1} parent=0
    #allocation2 [shape = 'u8[16384]{0}', space=vmem, size = 0x4000, scoped, tag = 'input window, operand 0']
    #allocation3 [shape = 's32[2]{0}', space=sflag, size = 0x8, scoped, tag = 'scoped memory for tpu_custom_call.1']
    #allocation4 [shape = 's32[2]{0}', space=sflag, size = 0x8, scoped, tag = 'scoped memory for tpu_custom_call.1']
    #allocation5 [shape = 'u8[16384]{0}', space=vmem, size = 0x4000, scoped, tag = 'output window, operand 0']
    %13 = vsyncpa [#allocation3], 0
    %s14 = scalar_lea.sflag [#allocation3], 1
    %15 = vsyncpa %s14, 0
    %16 = vsyncpa [#allocation4], 0
    %s17 = scalar_lea.sflag [#allocation4], 1
    %18 = vsyncpa %s17, 0
    loop: start=0, step=1, limit=4
    $region2: #{tpu_custom_call.1} parent=1 // loop_pre_header
      _
    $region3: #{tpu_custom_call.1} parent=1 // loop_header
      %s20 = sphi 0, %s24
      %p21 = scmp.ge.s32.totalorder %s20, 4
      %s30 = sphi 0, %s32
      %s33 = sphi 0, %s30
      %s34 = sphi 0, %s33
      %s50 = sphi 0, %s34
      %s54 = sphi 0, %s54
      %s56 = sphi 0, %s54
      %s57 = sphi 0, %s56
      %s71 = sphi 0, %s57
      %s75 = sphi 0, %s75
      %s77 = sphi 0, %s75
      %s78 = sphi 0, %s77
      %s92 = sphi 0, %s78
      %s96 = sphi 0, %s96
      %s98 = sphi 0, %s96
      %s99 = sphi 0, %s98
      %s113 = sphi 0, %s99
      %s117 = sphi 0, %s117
      %s119 = sphi 0, %s117
      %s120 = sphi 0, %s119
      %s134 = sphi 0, %s120
      %s138 = sphi 0, %s138
      %s140 = sphi 0, %s138
      %s141 = sphi 0, %s140
      %s155 = sphi 0, %s141
      %s159 = sphi 0, %s159
      %s161 = sphi 0, %s159
      %s162 = sphi 0, %s161
      %s176 = sphi 0, %s162
      %s180 = sphi 0, %s180
      %s182 = sphi 0, %s180
      %s183 = sphi 0, %s182
      %s197 = sphi 0, %s183
      %s203 = sphi 0, %s205
      %s206 = sphi 0, %s203
      %s207 = sphi 0, %s206
      %s223 = sphi 0, %s207
    $region4: #{tpu_custom_call.1} parent=1 // loop_header_branch
      %23 = sbr.rel (%p21) target = $region8
    $region5: #{tpu_custom_call.1} parent=1 // loop_body
      %s25 = ssub.s32 %s20, 1
      %s26 = ssub.s32 %s20, 2
      %s27 = sadd.s32 %s20, 1
      %s28 = ssub.s32 %s20, %s27
      %p29 = scmp.eq.s32.totalorder %s28, 0
      %s31 = sadd.s32 %s30, 1
      %s32 = scalar_select %p29, %s30, %s31
      %p35 = pneg %p29
      %p36 = scmp.eq.s32.totalorder %s20, 1
      %p37 = por %p35, %p36
      %p38 = scmp.ne.s32.totalorder %s30, %s33
      %p39 = scmp.eq.s32.totalorder %s20, 0
      %p40 = por %p38, %p39
      %p41 = scmp.ne.s32.totalorder %s30, %s33
      %p42 = scmp.eq.s32.totalorder %s25, 1
      %p43 = por %p41, %p42
      %p44 = scmp.ne.s32.totalorder %s33, %s34
      %p45 = scmp.eq.s32.totalorder %s25, 0
      %p46 = por %p44, %p45
      %p47 = scmp.ne.s32.totalorder %s33, %s34
      %p48 = scmp.eq.s32.totalorder %s26, 1
      %p49 = por %p47, %p48
      %p51 = scmp.ne.s32.totalorder %s34, %s50
      %p52 = scmp.eq.s32.totalorder %s26, 0
      %p53 = por %p51, %p52
      %s55 = sadd.s32 %s54, 1
      %p58 = scmp.eq.s32.totalorder %s20, 1
      %p59 = scmp.ne.s32.totalorder %s54, %s56
      %p60 = scmp.eq.s32.totalorder %s20, 0
      %p61 = por %p59, %p60
      %p62 = scmp.ne.s32.totalorder %s54, %s56
      %p63 = scmp.eq.s32.totalorder %s25, 1
      %p64 = por %p62, %p63
      %p65 = scmp.ne.s32.totalorder %s56, %s57
      %p66 = scmp.eq.s32.totalorder %s25, 0
      %p67 = por %p65, %p66
      %p68 = scmp.ne.s32.totalorder %s56, %s57
      %p69 = scmp.eq.s32.totalorder %s26, 1
      %p70 = por %p68, %p69
      %p72 = scmp.ne.s32.totalorder %s57, %s71
      %p73 = scmp.eq.s32.totalorder %s26, 0
      %p74 = por %p72, %p73
      %s76 = sadd.s32 %s75, 1
      %p79 = scmp.eq.s32.totalorder %s20, 1
      %p80 = scmp.ne.s32.totalorder %s75, %s77
      %p81 = scmp.eq.s32.totalorder %s20, 0
      %p82 = por %p80, %p81
      %p83 = scmp.ne.s32.totalorder %s75, %s77
      %p84 = scmp.eq.s32.totalorder %s25, 1
      %p85 = por %p83, %p84
      %p86 = scmp.ne.s32.totalorder %s77, %s78
      %p87 = scmp.eq.s32.totalorder %s25, 0
      %p88 = por %p86, %p87
      %p89 = scmp.ne.s32.totalorder %s77, %s78
      %p90 = scmp.eq.s32.totalorder %s26, 1
      %p91 = por %p89, %p90
      %p93 = scmp.ne.s32.totalorder %s78, %s92
      %p94 = scmp.eq.s32.totalorder %s26, 0
      %p95 = por %p93, %p94
      %s97 = sadd.s32 %s96, 1
      %p100 = scmp.eq.s32.totalorder %s20, 1
      %p101 = scmp.ne.s32.totalorder %s96, %s98
      %p102 = scmp.eq.s32.totalorder %s20, 0
      %p103 = por %p101, %p102
      %p104 = scmp.ne.s32.totalorder %s96, %s98
      %p105 = scmp.eq.s32.totalorder %s25, 1
      %p106 = por %p104, %p105
      %p107 = scmp.ne.s32.totalorder %s98, %s99
      %p108 = scmp.eq.s32.totalorder %s25, 0
      %p109 = por %p107, %p108
      %p110 = scmp.ne.s32.totalorder %s98, %s99
      %p111 = scmp.eq.s32.totalorder %s26, 1
      %p112 = por %p110, %p111
      %p114 = scmp.ne.s32.totalorder %s99, %s113
      %p115 = scmp.eq.s32.totalorder %s26, 0
      %p116 = por %p114, %p115
      %s118 = sadd.s32 %s117, 1
      %p121 = scmp.eq.s32.totalorder %s20, 1
      %p122 = scmp.ne.s32.totalorder %s117, %s119
      %p123 = scmp.eq.s32.totalorder %s20, 0
      %p124 = por %p122, %p123
      %p125 = scmp.ne.s32.totalorder %s117, %s119
      %p126 = scmp.eq.s32.totalorder %s25, 1
      %p127 = por %p125, %p126
      %p128 = scmp.ne.s32.totalorder %s119, %s120
      %p129 = scmp.eq.s32.totalorder %s25, 0
      %p130 = por %p128, %p129
      %p131 = scmp.ne.s32.totalorder %s119, %s120
      %p132 = scmp.eq.s32.totalorder %s26, 1
      %p133 = por %p131, %p132
      %p135 = scmp.ne.s32.totalorder %s120, %s134
      %p136 = scmp.eq.s32.totalorder %s26, 0
      %p137 = por %p135, %p136
      %s139 = sadd.s32 %s138, 1
      %p142 = scmp.eq.s32.totalorder %s20, 1
      %p143 = scmp.ne.s32.totalorder %s138, %s140
      %p144 = scmp.eq.s32.totalorder %s20, 0
      %p145 = por %p143, %p144
      %p146 = scmp.ne.s32.totalorder %s138, %s140
      %p147 = scmp.eq.s32.totalorder %s25, 1
      %p148 = por %p146, %p147
      %p149 = scmp.ne.s32.totalorder %s140, %s141
      %p150 = scmp.eq.s32.totalorder %s25, 0
      %p151 = por %p149, %p150
      %p152 = scmp.ne.s32.totalorder %s140, %s141
      %p153 = scmp.eq.s32.totalorder %s26, 1
      %p154 = por %p152, %p153
      %p156 = scmp.ne.s32.totalorder %s141, %s155
      %p157 = scmp.eq.s32.totalorder %s26, 0
      %p158 = por %p156, %p157
      %s160 = sadd.s32 %s159, 1
      %p163 = scmp.eq.s32.totalorder %s20, 1
      %p164 = scmp.ne.s32.totalorder %s159, %s161
      %p165 = scmp.eq.s32.totalorder %s20, 0
      %p166 = por %p164, %p165
      %p167 = scmp.ne.s32.totalorder %s159, %s161
      %p168 = scmp.eq.s32.totalorder %s25, 1
      %p169 = por %p167, %p168
      %p170 = scmp.ne.s32.totalorder %s161, %s162
      %p171 = scmp.eq.s32.totalorder %s25, 0
      %p172 = por %p170, %p171
      %p173 = scmp.ne.s32.totalorder %s161, %s162
      %p174 = scmp.eq.s32.totalorder %s26, 1
      %p175 = por %p173, %p174
      %p177 = scmp.ne.s32.totalorder %s162, %s176
      %p178 = scmp.eq.s32.totalorder %s26, 0
      %p179 = por %p177, %p178
      %s181 = sadd.s32 %s180, 1
      %p184 = scmp.eq.s32.totalorder %s20, 1
      %p185 = scmp.ne.s32.totalorder %s180, %s182
      %p186 = scmp.eq.s32.totalorder %s20, 0
      %p187 = por %p185, %p186
      %p188 = scmp.ne.s32.totalorder %s180, %s182
      %p189 = scmp.eq.s32.totalorder %s25, 1
      %p190 = por %p188, %p189
      %p191 = scmp.ne.s32.totalorder %s182, %s183
      %p192 = scmp.eq.s32.totalorder %s25, 0
      %p193 = por %p191, %p192
      %p194 = scmp.ne.s32.totalorder %s182, %s183
      %p195 = scmp.eq.s32.totalorder %s26, 1
      %p196 = por %p194, %p195
      %p198 = scmp.ne.s32.totalorder %s183, %s197
      %p199 = scmp.eq.s32.totalorder %s26, 0
      %p200 = por %p198, %p199
      %s201 = ssub.s32 %s20, %s27
      %p202 = scmp.eq.s32.totalorder %s201, 0
      %s204 = sadd.s32 %s203, 1
      %s205 = scalar_select %p202, %s203, %s204
      %p208 = pneg %p202
      %p209 = scmp.eq.s32.totalorder %s20, 1
      %p210 = por %p208, %p209
      %p211 = scmp.ne.s32.totalorder %s203, %s206
      %p212 = scmp.eq.s32.totalorder %s20, 0
      %p213 = por %p211, %p212
      %p214 = scmp.ne.s32.totalorder %s203, %s206
      %p215 = scmp.eq.s32.totalorder %s25, 1
      %p216 = por %p214, %p215
      %p217 = scmp.ne.s32.totalorder %s206, %s207
      %p218 = scmp.eq.s32.totalorder %s25, 0
      %p219 = por %p217, %p218
      %p220 = scmp.ne.s32.totalorder %s206, %s207
      %p221 = scmp.eq.s32.totalorder %s26, 1
      %p222 = por %p220, %p221
      %p224 = scmp.ne.s32.totalorder %s207, %s223
      %p225 = scmp.eq.s32.totalorder %s26, 0
      %p226 = por %p224, %p225
      %p227 = scmp.le.s32.totalorder 1, %s20
      %p228 = scmp.lt.s32.totalorder %s20, 3
      %p229 = pnand %p227, %p228
      %p230 = pneg %p229
      // Predicated region
      $region9: #{tpu_custom_call.1} parent=5 // pred_check
        _
      $region10: #{tpu_custom_call.1} parent=5 // pred_check_branch
        %232 = sbr.rel (%p229) target = $region12
      $region11: #{tpu_custom_call.1} parent=5 // pred_region
        %s233 = ssub.s32 %s20, 1
        // Predicated region
        $region13: #{tpu_custom_call.1} parent=11 // pred_check
          %p234 = pneg %p67
        $region14: #{tpu_custom_call.1} parent=11 // pred_check_branch
          %236 = sbr.rel (%p234) target = $region16
        $region15: #{tpu_custom_call.1} parent=11 // pred_region
          _
        $region16: #{tpu_custom_call.1} parent=11 // pred_fallthru
          _
        // Predicated region
        $region17: #{tpu_custom_call.1} parent=11 // pred_check
          %p237 = pneg %p88
        $region18: #{tpu_custom_call.1} parent=11 // pred_check_branch
          %239 = sbr.rel (%p237) target = $region20
        $region19: #{tpu_custom_call.1} parent=11 // pred_region
          _
        $region20: #{tpu_custom_call.1} parent=11 // pred_fallthru
          _
        // Predicated region
        $region21: #{tpu_custom_call.1} parent=11 // pred_check
          %p240 = pneg %p109
        $region22: #{tpu_custom_call.1} parent=11 // pred_check_branch
          %242 = sbr.rel (%p240) target = $region24
        $region23: #{tpu_custom_call.1} parent=11 // pred_region
          _
        $region24: #{tpu_custom_call.1} parent=11 // pred_fallthru
          _
        // Predicated region
        $region25: #{tpu_custom_call.1} parent=11 // pred_check
          %p243 = pneg %p130
        $region26: #{tpu_custom_call.1} parent=11 // pred_check_branch
          %245 = sbr.rel (%p243) target = $region28
        $region27: #{tpu_custom_call.1} parent=11 // pred_region
          _
        $region28: #{tpu_custom_call.1} parent=11 // pred_fallthru
          _
        // Predicated region
        $region29: #{tpu_custom_call.1} parent=11 // pred_check
          %p246 = pneg %p151
        $region30: #{tpu_custom_call.1} parent=11 // pred_check_branch
          %248 = sbr.rel (%p246) target = $region32
        $region31: #{tpu_custom_call.1} parent=11 // pred_region
          _
        $region32: #{tpu_custom_call.1} parent=11 // pred_fallthru
          _
        // Predicated region
        $region33: #{tpu_custom_call.1} parent=11 // pred_check
          %p249 = pneg %p172
        $region34: #{tpu_custom_call.1} parent=11 // pred_check_branch
          %251 = sbr.rel (%p249) target = $region36
        $region35: #{tpu_custom_call.1} parent=11 // pred_region
          _
        $region36: #{tpu_custom_call.1} parent=11 // pred_fallthru
          _
        // Predicated region
        $region37: #{tpu_custom_call.1} parent=11 // pred_check
          %p252 = pneg %p193
        $region38: #{tpu_custom_call.1} parent=11 // pred_check_branch
          %254 = sbr.rel (%p252) target = $region40
        $region39: #{tpu_custom_call.1} parent=11 // pred_region
          _
        $region40: #{tpu_custom_call.1} parent=11 // pred_fallthru
          _
      $region12: #{tpu_custom_call.1} parent=5 // pred_fallthru
        _
      %p255 = scmp.lt.s32.totalorder %s20, 2
      // Predicated region
      $region41: #{tpu_custom_call.1} parent=5 // pred_check
        %p256 = pneg %p255
      $region42: #{tpu_custom_call.1} parent=5 // pred_check_branch
        %258 = sbr.rel (%p256) target = $region44
      $region43: #{tpu_custom_call.1} parent=5 // pred_region
        // Predicated region
        $region45: #{tpu_custom_call.1} parent=43 // pred_check
          %p259 = pneg %p40
        $region46: #{tpu_custom_call.1} parent=43 // pred_check_branch
          %261 = sbr.rel (%p259) target = $region48
        $region47: #{tpu_custom_call.1} parent=43 // pred_region
          %s262 = sand.u32 %s30, 1
          %s263 = scalar_lea.sflag [#allocation3], %s262
          %s264 = sand.u32 %s30, 1
          %s265 = smul.addr %s264, 16
          %s266 = scalar_lea.vmem [#allocation2], %s265
          %s268 = ssub.s32 256, 256
          %269 = vsyncadd %s263, %s268
          %s270 = smul.addr %s20, 2
          %s271 = smul.addr %s270, 128
          %s272 = scalar_lea.hbm %s0, %s271
          %s274 = sshll.u32 %s266, 4
          %s275 = int_to_ptr.vmem [resolvable:$true] %s274
          %277 = dma.hbm_to_vmem [thread:$0]  %s272, 256, %s275, %s263
        $region48: #{tpu_custom_call.1} parent=43 // pred_fallthru
          _
      $region44: #{tpu_custom_call.1} parent=5 // pred_fallthru
        _
      %p278 = scmp.le.s32.totalorder 1, %s20
      %p279 = scmp.lt.s32.totalorder %s20, 3
      %p280 = pnand %p278, %p279
      %p281 = pneg %p280
      // Predicated region
      $region49: #{tpu_custom_call.1} parent=5 // pred_check
        _
      $region50: #{tpu_custom_call.1} parent=5 // pred_check_branch
        %283 = sbr.rel (%p280) target = $region52
      $region51: #{tpu_custom_call.1} parent=5 // pred_region
        %s284 = ssub.s32 %s20, 1
        %s285 = sand.u32 %s33, 1
        %s286 = scalar_lea.sflag [#allocation3], %s285
        %s287 = sand.u32 %s33, 1
        %s288 = smul.addr %s287, 16
        %s289 = scalar_lea.vmem [#allocation2], %s288
        // Predicated region
        $region53: #{tpu_custom_call.1} parent=51 // pred_check
          %p290 = pneg %p46
        $region54: #{tpu_custom_call.1} parent=51 // pred_check_branch
          %292 = sbr.rel (%p290) target = $region56
        $region55: #{tpu_custom_call.1} parent=51 // pred_region
          %293 = dma.done %s286, 256
        $region56: #{tpu_custom_call.1} parent=51 // pred_fallthru
          _
        %s294 = sand.u32 %s33, 1
        %s295 = scalar_lea.sflag [#allocation3], %s294
        %s296 = sand.u32 %s33, 1
        %s297 = smul.addr %s296, 16
        %s298 = scalar_lea.vmem [#allocation2], %s297
        %p299 = pneg %p46
        %p300 = pneg %p43
        %p301 = pneg %p67
        %p302 = pneg %p64
        %p303 = pneg %p88
        %p304 = pneg %p85
        %p305 = pneg %p109
        %p306 = pneg %p106
        %p307 = pneg %p130
        %p308 = pneg %p127
        %p309 = pneg %p151
        %p310 = pneg %p148
        %p311 = pneg %p172
        %p312 = pneg %p169
        %p313 = pneg %p193
        %p314 = pneg %p190
        %p315 = pneg %p219
        %p316 = pneg %p216
        %s317 = sand.u32 %s206, 1
        %s318 = scalar_lea.sflag [#allocation4], %s317
        %s319 = sand.u32 %s206, 1
        %s320 = smul.addr %s319, 16
        %s321 = scalar_lea.vmem [#allocation5], %s320
        %v323 = vld [vmem:[%s6] sm:$0x3]
        %v324 = vld [vmem:[%s7] sm:$0x3]
        %vm325 = vcmp.ge.s32.totalorder %v323, 1
        %vm326 = vcmp.ge.s32.totalorder %v324, 1
        %vm327 = vmand %vm325, %vm326
        %vm328 = vcmp.le.s32.totalorder %v324, 14
        %vm329 = vmand %vm325, %vm328
        %vm330 = vcmp.le.s32.totalorder %v323, 14
        %vm331 = vmand %vm330, %vm326
        %vm332 = vmand %vm330, %vm328
        %v333 = vld [vmem:[%s1] sm:$0xf]
        %v334 = vld [vmem:[%s4] sm:$0xf]
        %v335 = vld [vmem:[%s2] sm:$0xff]
        %v336 = vld [vmem:[%s3] sm:$0xff]
        %v337 = vld [vmem:[%s5] sm:$0xff]
        %v338 = vld [vmem:[%s289] sm:$0xff]
        %v339 = vld [vmem:[%s289 + $0x8] sm:$0xff]
        %340 = vrot.lane.b32.xlu0 %v338, 17
        %v341 = vpop.permute.xlu0 %340
        %342 = vrot.lane.b32.xlu0 %v339, 17
        %v343 = vpop.permute.xlu0 %342
        %v344 = vlaneseq
        %v345 = vand.u32 %v344, 127
        %vm346 = vcmp.lt.s32.totalorder %v345, 17
        %v347 = vsel %vm346, %v341, %v343
        %v348 = vsel %vm346, %v343, %v341
        %v349 = vsel %vm327, 1, 0
        %v350 = vlaneseq
        %v351 = vshrl.u32 %v350, 7
        %v352 = vsub.s32 0, %v351
        %v353 = vrot.slane %v349, %v352
        %v354 = vlaneseq
        %v355 = vshrl.u32 %v354, 7
        %v356 = vsub.s32 1, %v355
        %v357 = vrot.slane %v349, %v356
        %vm358 = vcmp.eq.s32.totalorder %v353, 1
        %vm359 = vcmp.eq.s32.totalorder %v357, 1
        %v360 = vsel %vm358, %v348, 0.0
        %v361 = vsel %vm359, %v347, 0.0
        %362 = vrot.lane.b32.xlu0 %v338, 16
        %v363 = vpop.permute.xlu0 %362
        %364 = vrot.lane.b32.xlu0 %v339, 16
        %v365 = vpop.permute.xlu0 %364
        %vm366 = vcmp.lt.s32.totalorder %v345, 16
        %v367 = vsel %vm366, %v363, %v365
        %v368 = vsel %vm366, %v365, %v363
        %v369 = vsel %vm325, 1, 0
        %v370 = vlaneseq
        %v371 = vshrl.u32 %v370, 7
        %v372 = vsub.s32 0, %v371
        %v373 = vrot.slane %v369, %v372
        %v374 = vlaneseq
        %v375 = vshrl.u32 %v374, 7
        %v376 = vsub.s32 1, %v375
        %v377 = vrot.slane %v369, %v376
        %vm378 = vcmp.eq.s32.totalorder %v373, 1
        %vm379 = vcmp.eq.s32.totalorder %v377, 1
        %v380 = vsel %vm378, %v368, 0.0
        %v381 = vsel %vm379, %v367, 0.0
        %382 = vrot.lane.b32.xlu0 %v338, 15
        %v383 = vpop.permute.xlu0 %382
        %384 = vrot.lane.b32.xlu0 %v339, 15
        %v385 = vpop.permute.xlu0 %384
        %vm386 = vcmp.lt.s32.totalorder %v345, 15
        %v387 = vsel %vm386, %v383, %v385
        %v388 = vsel %vm386, %v385, %v383
        %v389 = vsel %vm329, 1, 0
        %v390 = vlaneseq
        %v391 = vshrl.u32 %v390, 7
        %v392 = vsub.s32 0, %v391
        %v393 = vrot.slane %v389, %v392
        %v394 = vlaneseq
        %v395 = vshrl.u32 %v394, 7
        %v396 = vsub.s32 1, %v395
        %v397 = vrot.slane %v389, %v396
        %vm398 = vcmp.eq.s32.totalorder %v393, 1
        %vm399 = vcmp.eq.s32.totalorder %v397, 1
        %v400 = vsel %vm398, %v388, 0.0
        %v401 = vsel %vm399, %v387, 0.0
        %402 = vrot.lane.b32.xlu0 %v338, 1
        %v403 = vpop.permute.xlu0 %402
        %404 = vrot.lane.b32.xlu0 %v339, 1
        %v405 = vpop.permute.xlu0 %404
        %vm406 = vcmp.lt.s32.totalorder %v345, 1
        %v407 = vsel %vm406, %v403, %v405
        %v408 = vsel %vm406, %v405, %v403
        %v409 = vsel %vm326, 1, 0
        %v410 = vlaneseq
        %v411 = vshrl.u32 %v410, 7
        %v412 = vsub.s32 0, %v411
        %v413 = vrot.slane %v409, %v412
        %v414 = vlaneseq
        %v415 = vshrl.u32 %v414, 7
        %v416 = vsub.s32 1, %v415
        %v417 = vrot.slane %v409, %v416
        %vm418 = vcmp.eq.s32.totalorder %v413, 1
        %vm419 = vcmp.eq.s32.totalorder %v417, 1
        %v420 = vsel %vm418, %v408, 0.0
        %v421 = vsel %vm419, %v407, 0.0
        %422 = vrot.lane.b32.xlu0 %v338, 127
        %v423 = vpop.permute.xlu0 %422
        %424 = vrot.lane.b32.xlu0 %v339, 127
        %v425 = vpop.permute.xlu0 %424
        %vm426 = vcmp.lt.s32.totalorder %v345, 127
        %v427 = vsel %vm426, %v423, %v425
        %v428 = vsel %vm426, %v425, %v423
        %v429 = vsel %vm328, 1, 0
        %v430 = vlaneseq
        %v431 = vshrl.u32 %v430, 7
        %v432 = vsub.s32 0, %v431
        %v433 = vrot.slane %v429, %v432
        %v434 = vlaneseq
        %v435 = vshrl.u32 %v434, 7
        %v436 = vsub.s32 1, %v435
        %v437 = vrot.slane %v429, %v436
        %vm438 = vcmp.eq.s32.totalorder %v433, 1
        %vm439 = vcmp.eq.s32.totalorder %v437, 1
        %v440 = vsel %vm438, %v427, 0.0
        %v441 = vsel %vm439, %v428, 0.0
        %442 = vrot.lane.b32.xlu0 %v338, 113
        %v443 = vpop.permute.xlu0 %442
        %444 = vrot.lane.b32.xlu0 %v339, 113
        %v445 = vpop.permute.xlu0 %444
        %vm446 = vcmp.lt.s32.totalorder %v345, 113
        %v447 = vsel %vm446, %v443, %v445
        %v448 = vsel %vm446, %v445, %v443
        %v449 = vsel %vm331, 1, 0
        %v450 = vlaneseq
        %v451 = vshrl.u32 %v450, 7
        %v452 = vsub.s32 0, %v451
        %v453 = vrot.slane %v449, %v452
        %v454 = vlaneseq
        %v455 = vshrl.u32 %v454, 7
        %v456 = vsub.s32 1, %v455
        %v457 = vrot.slane %v449, %v456
        %vm458 = vcmp.eq.s32.totalorder %v453, 1
        %vm459 = vcmp.eq.s32.totalorder %v457, 1
        %v460 = vsel %vm458, %v447, 0.0
        %v461 = vsel %vm459, %v448, 0.0
        %462 = vrot.lane.b32.xlu0 %v338, 112
        %v463 = vpop.permute.xlu0 %462
        %464 = vrot.lane.b32.xlu0 %v339, 112
        %v465 = vpop.permute.xlu0 %464
        %vm466 = vcmp.lt.s32.totalorder %v345, 112
        %v467 = vsel %vm466, %v463, %v465
        %v468 = vsel %vm466, %v465, %v463
        %v469 = vsel %vm330, 1, 0
        %v470 = vlaneseq
        %v471 = vshrl.u32 %v470, 7
        %v472 = vsub.s32 0, %v471
        %v473 = vrot.slane %v469, %v472
        %v474 = vlaneseq
        %v475 = vshrl.u32 %v474, 7
        %v476 = vsub.s32 1, %v475
        %v477 = vrot.slane %v469, %v476
        %vm478 = vcmp.eq.s32.totalorder %v473, 1
        %vm479 = vcmp.eq.s32.totalorder %v477, 1
        %v480 = vsel %vm478, %v467, 0.0
        %v481 = vsel %vm479, %v468, 0.0
        %482 = vrot.lane.b32.xlu0 %v338, 111
        %v483 = vpop.permute.xlu0 %482
        %484 = vrot.lane.b32.xlu0 %v339, 111
        %v485 = vpop.permute.xlu0 %484
        %vm486 = vcmp.lt.s32.totalorder %v345, 111
        %v487 = vsel %vm486, %v483, %v485
        %v488 = vsel %vm486, %v485, %v483
        %v489 = vsel %vm332, 1, 0
        %v490 = vlaneseq
        %v491 = vshrl.u32 %v490, 7
        %v492 = vsub.s32 0, %v491
        %v493 = vrot.slane %v489, %v492
        %v494 = vlaneseq
        %v495 = vshrl.u32 %v494, 7
        %v496 = vsub.s32 1, %v495
        %v497 = vrot.slane %v489, %v496
        %vm498 = vcmp.eq.s32.totalorder %v493, 1
        %vm499 = vcmp.eq.s32.totalorder %v497, 1
        %v500 = vsel %vm498, %v487, 0.0
        %v501 = vsel %vm499, %v488, 0.0
        %v502 = vpack.c.bf16 %v380, %v360
        %v503 = vpack.c.bf16 %v381, %v361
        %v504 = vpack.c.bf16 %v420, %v400
        %v505 = vpack.c.bf16 %v421, %v401
        %v506 = vpack.c.bf16 %v440, %v338
        %v507 = vpack.c.bf16 %v441, %v339
        %v508 = vpack.c.bf16 %v480, %v460
        %v509 = vpack.c.bf16 %v481, %v461
        %v510 = vpack.c.bf16 %v500, %v500
        %v511 = vpack.c.bf16 %v501, %v501
        %vm512 = vcmask 588800
        %v514 = vsel %vm512, %v333, 0
        %vm516 = vcmask 1043456
        %v518 = vsel %vm516, %v510, 0
        %v521 = vsel %vm516, %v511, 0
        %523 = vmatprep.subr.bf16.mxu0 %v503
        %524 = vmatpush1.bf16.msra.mxu0 %v502
        %525 = vmatprep.subr.bf16.mxu0 %v505
        %526 = vmatpush1.bf16.msra.mxu0 %v504
        %527 = vmatprep.subr.bf16.mxu0 %v507
        %528 = vmatpush1.bf16.msra.mxu0 %v506
        %529 = vmatprep.subr.bf16.mxu0 %v509
        %530 = vmatpush1.bf16.msra.mxu0 %v508
        %531 = vmatprep.subr.bf16.mxu0 %v521
        %532 = vmatpush1.bf16.msra.mxu0 %v518
        %533 = vmatprep.subr.bf16.mxu0 0
        %534 = vmatpush1.bf16.msra.mxu0 0
        %535 = vmatprep.subr.bf16.mxu0 0
        %536 = vmatpush1.bf16.msra.mxu0 0
        %537 = vmatprep.subr.bf16.mxu0 0
        %538 = vmatpush1.bf16.msra.mxu0 0
        %539 = vmatprep.subr.bf16.mxu0 0
        %540 = vmatpush1.bf16.msra.mxu0 0
        %541 = vmatprep.subr.bf16.mxu0 0
        %542 = vmatpush1.bf16.msra.mxu0 0
        %543 = vmatprep.subr.bf16.mxu0 0
        %544 = vmatpush1.bf16.msra.mxu0 0
        %545 = vmatprep.subr.bf16.mxu0 0
        %546 = vmatpush1.bf16.msra.mxu0 0
        %547 = vmatprep.subr.bf16.mxu0 0
        %548 = vmatpush1.bf16.msra.mxu0 0
        %549 = vmatprep.subr.bf16.mxu0 0
        %550 = vmatpush1.bf16.msra.mxu0 0
        %551 = vmatprep.subr.bf16.mxu0 0
        %552 = vmatpush1.bf16.msra.mxu0 0
        %553 = vmatprep.subr.bf16.mxu0 0
        %554 = vmatpush1.bf16.msra.mxu0 0
        %555 = vmatprep.mubr.bf16.mxu0 0
        %556 = vmatmul.mubr.bf16.gmra.mrb[0].mxu0 %v514
        %v557 = vpop.f32.mrb[0].mxu0
        %v558 = vadd.f32 0.0, %v557
        %v559 = vpop.f32.mrb[0].mxu0
        %v560 = vadd.f32 0.0, %v559
        %v561 = vpop.f32.mrb[0].mxu0
        %v562 = vpop.f32.mrb[0].mxu0
        %563 = vdwg.mxu0
        %565 = vset.pattern.permute.xlu0 0
        %566 = vperm.xlu0 %565, %v335
        %v567 = vpop.permute.xlu0 %566
        %v569 = vmul.f32 %v558, %v567
        %v570 = vmul.f32 %v560, %v567
        %572 = vset.pattern.permute.xlu0 0
        %573 = vperm.xlu0 %572, %v336
        %v574 = vpop.permute.xlu0 %573
        %v576 = vadd.f32 %v569, %v574
        %v577 = vadd.f32 %v570, %v574
        %v578 = vmul.f32 %v576, 0.1
        %v579 = vmul.f32 %v577, 0.1
        %v580 = vmax.f32 %v576, %v578
        %v581 = vmax.f32 %v577, %v579
        %582 = vrot.lane.b32.xlu0 %v580, 17
        %v583 = vpop.permute.xlu0 %582
        %584 = vrot.lane.b32.xlu0 %v581, 17
        %v585 = vpop.permute.xlu0 %584
        %v586 = vsel %vm346, %v583, %v585
        %v587 = vsel %vm346, %v585, %v583
        %v588 = vsel %vm358, %v587, 0.0
        %v589 = vsel %vm359, %v586, 0.0
        %590 = vrot.lane.b32.xlu0 %v580, 16
        %v591 = vpop.permute.xlu0 %590
        %592 = vrot.lane.b32.xlu0 %v581, 16
        %v593 = vpop.permute.xlu0 %592
        %v594 = vsel %vm366, %v591, %v593
        %v595 = vsel %vm366, %v593, %v591
        %v596 = vsel %vm378, %v595, 0.0
        %v597 = vsel %vm379, %v594, 0.0
        %598 = vrot.lane.b32.xlu0 %v580, 15
        %v599 = vpop.permute.xlu0 %598
        %600 = vrot.lane.b32.xlu0 %v581, 15
        %v601 = vpop.permute.xlu0 %600
        %v602 = vsel %vm386, %v599, %v601
        %v603 = vsel %vm386, %v601, %v599
        %v604 = vsel %vm398, %v603, 0.0
        %v605 = vsel %vm399, %v602, 0.0
        %606 = vrot.lane.b32.xlu0 %v580, 1
        %v607 = vpop.permute.xlu0 %606
        %608 = vrot.lane.b32.xlu0 %v581, 1
        %v609 = vpop.permute.xlu0 %608
        %v610 = vsel %vm406, %v607, %v609
        %v611 = vsel %vm406, %v609, %v607
        %v612 = vsel %vm418, %v611, 0.0
        %v613 = vsel %vm419, %v610, 0.0
        %614 = vrot.lane.b32.xlu0 %v580, 127
        %v615 = vpop.permute.xlu0 %614
        %616 = vrot.lane.b32.xlu0 %v581, 127
        %v617 = vpop.permute.xlu0 %616
        %v618 = vsel %vm426, %v615, %v617
        %v619 = vsel %vm426, %v617, %v615
        %v620 = vsel %vm438, %v618, 0.0
        %v621 = vsel %vm439, %v619, 0.0
        %622 = vrot.lane.b32.xlu0 %v580, 113
        %v623 = vpop.permute.xlu0 %622
        %624 = vrot.lane.b32.xlu0 %v581, 113
        %v625 = vpop.permute.xlu0 %624
        %v626 = vsel %vm446, %v623, %v625
        %v627 = vsel %vm446, %v625, %v623
        %v628 = vsel %vm458, %v626, 0.0
        %v629 = vsel %vm459, %v627, 0.0
        %630 = vrot.lane.b32.xlu0 %v580, 112
        %v631 = vpop.permute.xlu0 %630
        %632 = vrot.lane.b32.xlu0 %v581, 112
        %v633 = vpop.permute.xlu0 %632
        %v634 = vsel %vm466, %v631, %v633
        %v635 = vsel %vm466, %v633, %v631
        %v636 = vsel %vm478, %v634, 0.0
        %v637 = vsel %vm479, %v635, 0.0
        %638 = vrot.lane.b32.xlu0 %v580, 111
        %v639 = vpop.permute.xlu0 %638
        %640 = vrot.lane.b32.xlu0 %v581, 111
        %v641 = vpop.permute.xlu0 %640
        %v642 = vsel %vm486, %v639, %v641
        %v643 = vsel %vm486, %v641, %v639
        %v644 = vsel %vm498, %v642, 0.0
        %v645 = vsel %vm499, %v643, 0.0
        %v646 = vpack.c.bf16 %v596, %v588
        %v647 = vpack.c.bf16 %v597, %v589
        %v648 = vpack.c.bf16 %v612, %v604
        %v649 = vpack.c.bf16 %v613, %v605
        %v650 = vpack.c.bf16 %v620, %v580
        %v651 = vpack.c.bf16 %v621, %v581
        %v652 = vpack.c.bf16 %v636, %v628
        %v653 = vpack.c.bf16 %v637, %v629
        %v654 = vpack.c.bf16 %v644, %v644
        %v655 = vpack.c.bf16 %v645, %v645
        %657 = vset.pattern.permute.xlu0 0
        %658 = vperm.xlu0 %657, %v337
        %v659 = vpop.permute.xlu0 %658
        %v662 = vsel %vm512, %v334, 0
        %v665 = vsel %vm516, %v654, 0
        %v668 = vsel %vm516, %v655, 0
        %670 = vmatprep.subr.bf16.mxu0 %v647
        %671 = vmatpush1.bf16.msra.mxu0 %v646
        %672 = vmatprep.subr.bf16.mxu0 %v649
        %673 = vmatpush1.bf16.msra.mxu0 %v648
        %674 = vmatprep.subr.bf16.mxu0 %v651
        %675 = vmatpush1.bf16.msra.mxu0 %v650
        %676 = vmatprep.subr.bf16.mxu0 %v653
        %677 = vmatpush1.bf16.msra.mxu0 %v652
        %678 = vmatprep.subr.bf16.mxu0 %v668
        %679 = vmatpush1.bf16.msra.mxu0 %v665
        %680 = vmatprep.subr.bf16.mxu0 0
        %681 = vmatpush1.bf16.msra.mxu0 0
        %682 = vmatprep.subr.bf16.mxu0 0
        %683 = vmatpush1.bf16.msra.mxu0 0
        %684 = vmatprep.subr.bf16.mxu0 0
        %685 = vmatpush1.bf16.msra.mxu0 0
        %686 = vmatprep.subr.bf16.mxu0 0
        %687 = vmatpush1.bf16.msra.mxu0 0
        %688 = vmatprep.subr.bf16.mxu0 0
        %689 = vmatpush1.bf16.msra.mxu0 0
        %690 = vmatprep.subr.bf16.mxu0 0
        %691 = vmatpush1.bf16.msra.mxu0 0
        %692 = vmatprep.subr.bf16.mxu0 0
        %693 = vmatpush1.bf16.msra.mxu0 0
        %694 = vmatprep.subr.bf16.mxu0 0
        %695 = vmatpush1.bf16.msra.mxu0 0
        %696 = vmatprep.subr.bf16.mxu0 0
        %697 = vmatpush1.bf16.msra.mxu0 0
        %698 = vmatprep.subr.bf16.mxu0 0
        %699 = vmatpush1.bf16.msra.mxu0 0
        %700 = vmatprep.subr.bf16.mxu0 0
        %701 = vmatpush1.bf16.msra.mxu0 0
        %702 = vmatprep.mubr.bf16.mxu0 0
        %703 = vmatmul.mubr.bf16.gmra.mrb[0].mxu0 %v662
        %v704 = vpop.f32.mrb[0].mxu0
        %v705 = vadd.f32 %v659, %v704
        %v706 = vpop.f32.mrb[0].mxu0
        %v707 = vadd.f32 %v659, %v706
        %v708 = vpop.f32.mrb[0].mxu0
        %v709 = vpop.f32.mrb[0].mxu0
        %710 = vdwg.mxu0
        %v711 = vadd.f32 %v338, %v705
        %v712 = vadd.f32 %v339, %v707
        %713 = vst [vmem:[%s321] sm:$0xff] %v711
        %714 = vst [vmem:[%s321 + $0x8] sm:$0xff] %v712
        %s715 = sand.u32 %s206, 1
        %s716 = scalar_lea.sflag [#allocation4], %s715
        %s717 = sand.u32 %s206, 1
        %s718 = smul.addr %s717, 16
        %s719 = scalar_lea.vmem [#allocation5], %s718
        // Predicated region
        $region57: #{tpu_custom_call.1} parent=51 // pred_check
          %p720 = pneg %p216
        $region58: #{tpu_custom_call.1} parent=51 // pred_check_branch
          %722 = sbr.rel (%p720) target = $region60
        $region59: #{tpu_custom_call.1} parent=51 // pred_region
          %s724 = ssub.s32 256, 256
          %725 = vsyncadd %s716, %s724
          %s726 = smul.addr %s25, 2
          %s727 = smul.addr %s726, 128
          %s728 = scalar_lea.hbm %s8, %s727
          %s730 = sshll.u32 %s719, 4
          %s731 = int_to_ptr.vmem [resolvable:$true] %s730
          %733 = dma.vmem_to_hbm [thread:$0]  %s731, 256, %s728, %s716
        $region60: #{tpu_custom_call.1} parent=51 // pred_fallthru
          _
      $region52: #{tpu_custom_call.1} parent=5 // pred_fallthru
        _
      %p734 = scmp.le.s32.totalorder 2, %s20
      // Predicated region
      $region61: #{tpu_custom_call.1} parent=5 // pred_check
        %p735 = pneg %p734
      $region62: #{tpu_custom_call.1} parent=5 // pred_check_branch
        %737 = sbr.rel (%p735) target = $region64
      $region63: #{tpu_custom_call.1} parent=5 // pred_region
        %s738 = ssub.s32 %s20, 2
        // Predicated region
        $region65: #{tpu_custom_call.1} parent=63 // pred_check
          %p739 = pneg %p222
        $region66: #{tpu_custom_call.1} parent=63 // pred_check_branch
          %741 = sbr.rel (%p739) target = $region68
        $region67: #{tpu_custom_call.1} parent=63 // pred_region
          %s742 = sand.u32 %s207, 1
          %s743 = scalar_lea.sflag [#allocation4], %s742
          %s744 = sand.u32 %s207, 1
          %s745 = smul.addr %s744, 16
          %s746 = scalar_lea.vmem [#allocation5], %s745
          %747 = dma.done %s743, 256
        $region68: #{tpu_custom_call.1} parent=63 // pred_fallthru
          _
      $region64: #{tpu_custom_call.1} parent=5 // pred_fallthru
        _
    $region6: #{tpu_custom_call.1} parent=1 // loop_footer
      %s24 = sadd.s32 1, %s20
    $region7: #{tpu_custom_call.1} parent=1 // loop_footer_branch
      %19 = sbr.rel target = $region3
    $region8: #{tpu_custom_call.1} parent=1 // loop_exit
      _
    %748 = vsyncpa [#allocation3], 1
    %s749 = scalar_lea.sflag [#allocation3], 1
    %750 = vsyncpa %s749, 1
    %751 = vsyncpa [#allocation4], 1
    %s752 = scalar_lea.sflag [#allocation4], 1
    %753 = vsyncpa %s752, 1

</llo_original>
